<compile_context>
chip_gen: v5e
topology: v5e:2x2
jax: 0.10.0
libtpu: 0.0.40
codegen_flags: <defaults>
</compile_context>

<pallas_src>
import functools

import jax
import jax.numpy as jnp
from jax import lax
from jax.experimental import pallas as pl
from jax.experimental.pallas import tpu as pltpu

TILE_N = 512                 # row tile for flattened pixels (clamped to problem size)
EPS = 1e-6                   # Norm2d eps
VMEM_LIMIT = 64 * 1024 * 1024


def _round_up(n, m):
    return ((n + m - 1) // m) * m


# ----------------------------------------------------------------------------- in-kernel math
def _erf_approx(x):
    # Abramowitz & Stegun 7.1.26 (~1.5e-7 abs err); reciprocal/exp routed to the EUP.
    p = 0.3275911
    a1, a2, a3, a4, a5 = 0.254829592, -0.284496736, 1.421413741, -1.453152027, 1.061405429
    ax = jnp.abs(x)
    t = pl.reciprocal(1.0 + p * ax, approx=True)
    poly = ((((a5 * t + a4) * t + a3) * t + a2) * t + a1) * t
    y = 1.0 - poly * jnp.exp(-ax * ax)
    return jnp.where(x < 0.0, -y, y)


def _gelu_exact(x):
    return 0.5 * x * (1.0 + _erf_approx(x * 0.7071067811865476))


# ----------------------------------------------------------------------------- kernels
def _fused_mm_kernel(*refs, n_in, use_bias, use_ln, groups, use_gelu):
    """[max of n_in inputs] @ W (+bias) -> grouped channel-LN -> optional GELU.

    All groups are normalized in registers and written with a single lane-dense
    store (no masked partial stores)."""
    o_ref = refs[-1]
    x = refs[0][...]
    for idx in range(1, n_in):                       # fused 2x2 max-pool (fpn4)
        x = jnp.maximum(x, refs[idx][...])
    w_ref = refs[n_in]
    y = jnp.dot(x, w_ref[...], preferred_element_type=jnp.float32)
    pos = n_in + 1
    if use_bias:
        y = y + refs[pos][...]
        pos += 1
    if use_ln:
        g = refs[pos][...]
        bb = refs[pos + 1][...]
        gm = y.shape[-1]
        m = gm // groups
        parts = []
        for s in range(groups):                      # groups = subpixels of a convT 2x2
            ys = y[:, s * m:(s + 1) * m] if groups > 1 else y
            u = jnp.mean(ys, axis=-1, keepdims=True)
            d = ys - u
            var = jnp.mean(d * d, axis=-1, keepdims=True)
            yn = d * lax.rsqrt(var + EPS)
            yn = yn * g + bb
            if use_gelu:
                yn = _gelu_exact(yn)
            parts.append(yn)
        out = parts[0] if groups == 1 else jnp.concatenate(parts, axis=-1)
        o_ref[...] = out.astype(o_ref.dtype)
    else:
        if use_gelu:
            y = _gelu_exact(y)
        o_ref[...] = y.astype(o_ref.dtype)


def _conv3x3_ln_kernel(x0_ref, x1_ref, x2_ref, w_ref, g_ref, b_ref, o_ref):
    """One output row: 9-tap accumulation (f32) + channel LayerNorm, no im2col."""
    w_out = o_ref.shape[2]
    rows = (x0_ref[0, 0], x1_ref[0, 0], x2_ref[0, 0])          # (W+2, Cin) each
    acc = None
    for di in range(3):
        for dj in range(3):
            xs = rows[di][dj:dj + w_out, :]                    # static width-tap slice
            t = jnp.dot(xs, w_ref[di, dj], preferred_element_type=jnp.float32)
            acc = t if acc is None else acc + t
    u = jnp.mean(acc, axis=-1, keepdims=True)
    d = acc - u
    var = jnp.mean(d * d, axis=-1, keepdims=True)
    y = d * lax.rsqrt(var + EPS)
    y = y * g_ref[...] + b_ref[...]
    o_ref[0, 0] = y.astype(o_ref.dtype)


# ----------------------------------------------------------------------------- wrappers
def fused_matmul(xs, w, bias=None, ln=None, groups=1, gelu=False,
                 out_dtype=jnp.bfloat16):
    """xs: list of (N, K) arrays (elementwise-maxed if >1); w: (K, groups*M)."""
    n, k = xs[0].shape
    gm = w.shape[1]
    tile = min(TILE_N, _round_up(n, 8))
    n_pad = _round_up(n, tile)

    def prep(a):
        a = a.astype(jnp.bfloat16)
        if n_pad != n:
            a = jnp.pad(a, ((0, n_pad - n), (0, 0)))
        return a

    xs = [prep(a) for a in xs]
    args = list(xs) + [w.astype(jnp.bfloat16)]
    in_specs = [pl.BlockSpec((tile, k), lambda i: (i, 0)) for _ in xs]
    in_specs.append(pl.BlockSpec((k, gm), lambda i: (0, 0)))
    if bias is not None:
        args.append(bias.reshape(1, gm).astype(jnp.float32))
        in_specs.append(pl.BlockSpec((1, gm), lambda i: (0, 0)))
    if ln is not None:
        m = gm // groups
        gamma, beta = ln
        args += [gamma.reshape(1, m).astype(jnp.float32),
                 beta.reshape(1, m).astype(jnp.float32)]
        in_specs += [pl.BlockSpec((1, m), lambda i: (0, 0)),
                     pl.BlockSpec((1, m), lambda i: (0, 0))]

    kernel = functools.partial(_fused_mm_kernel, n_in=len(xs),
                               use_bias=bias is not None, use_ln=ln is not None,
                               groups=groups, use_gelu=gelu)
    out = pl.pallas_call(
        kernel,
        out_shape=jax.ShapeDtypeStruct((n_pad, gm), out_dtype),
        grid=(n_pad // tile,),
        in_specs=in_specs,
        out_specs=pl.BlockSpec((tile, gm), lambda i: (i, 0)),
        compiler_params=pltpu.CompilerParams(
            dimension_semantics=("parallel",),
            vmem_limit_bytes=VMEM_LIMIT),
    )(*args)
    return out[:n] if n_pad != n else out


def conv3x3_ln(x, w_oihw, gamma, beta):
    """x: (B, H, W, Cin) NHWC; 3x3/pad1/no-bias conv + Norm2d, per-row grid."""
    B, H, W, Cin = x.shape
    Cout = w_oihw.shape[0]
    xp = jnp.pad(x.astype(jnp.bfloat16), ((0, 0), (1, 1), (1, 1), (0, 0)))
    wt = jnp.transpose(w_oihw, (2, 3, 1, 0)).astype(jnp.bfloat16)   # (3,3,Cin,Cout)
    out = pl.pallas_call(
        _conv3x3_ln_kernel,
        out_shape=jax.ShapeDtypeStruct((B, H, W, Cout), jnp.float32),
        grid=(B, H),
        in_specs=[
            # three row taps of the SAME padded array (no HBM duplication)
            pl.BlockSpec((1, 1, W + 2, Cin), lambda b, i: (b, i, 0, 0)),
            pl.BlockSpec((1, 1, W + 2, Cin), lambda b, i: (b, i + 1, 0, 0)),
            pl.BlockSpec((1, 1, W + 2, Cin), lambda b, i: (b, i + 2, 0, 0)),
            pl.BlockSpec((3, 3, Cin, Cout), lambda b, i: (0, 0, 0, 0)),
            pl.BlockSpec((1, Cout), lambda b, i: (0, 0)),
            pl.BlockSpec((1, Cout), lambda b, i: (0, 0)),
        ],
        out_specs=pl.BlockSpec((1, 1, W, Cout), lambda b, i: (b, i, 0, 0)),
        compiler_params=pltpu.CompilerParams(
            dimension_semantics=("parallel", "parallel"),
            vmem_limit_bytes=VMEM_LIMIT),
    )(xp, xp, xp, wt,
      gamma.reshape(1, Cout).astype(jnp.float32),
      beta.reshape(1, Cout).astype(jnp.float32))
    return out


# ----------------------------------------------------------------------------- FPN heads (NHWC in)
def fpn1(p, x):
    B, H, W, embed = x.shape
    e2, e4 = embed // 2, embed // 4
    vis = p['f1_c1_w'].shape[0]
    # stage 1: ConvT(embed->e2) + Norm2d(e2) + GELU, subpixel-major grouped LN
    w1 = jnp.transpose(p['f1_ct1_w'], (0, 2, 3, 1)).reshape(embed, 4 * e2)
    b1 = jnp.tile(p['f1_ct1_b'], 4)
    h = fused_matmul([x.reshape(-1, embed)], w1, bias=b1,
                     ln=(p['f1_n1_g'], p['f1_n1_b']), groups=4, gelu=True)
    h = h.reshape(-1, e2)                               # rows: (b, i, j, s1)
    # stage 2: ConvT(e2->e4) folded with Conv1x1(e4->vis, no bias) + Norm2d(vis)
    w3m = jnp.transpose(p['f1_c1_w'].reshape(vis, e4))                  # (e4, vis)
    wt2 = jnp.transpose(p['f1_ct2_w'], (0, 2, 3, 1))                    # (e2,2,2,e4)
    wc = jnp.einsum('cdem,mv->cdev', wt2, w3m).reshape(e2, 4 * vis)
    bc = jnp.tile(p['f1_ct2_b'] @ w3m, 4)
    h = fused_matmul([h], wc, bias=bc, ln=(p['f1_c1_g'], p['f1_c1_b']), groups=4)
    # (b,i,j,di1,dj1) rows x (di2,dj2,v) cols -> spatial (B, 4H, 4W, vis)
    h = h.reshape(B, H, W, 2, 2, 2, 2, vis)
    h = jnp.transpose(h, (0, 1, 3, 5, 2, 4, 6, 7)).reshape(B, 4 * H, 4 * W, vis)
    out = conv3x3_ln(h, p['f1_c2_w'], p['f1_c2_g'], p['f1_c2_b'])
    return jnp.transpose(out, (0, 3, 1, 2))


def fpn2(p, x):
    B, H, W, embed = x.shape
    e2 = embed // 2
    vis = p['f2_c1_w'].shape[0]
    # ConvT(embed->e2) folded with Conv1x1(e2->vis, no bias) + Norm2d(vis)
    w1m = jnp.transpose(p['f2_c1_w'].reshape(vis, e2))                  # (e2, vis)
    wt = jnp.transpose(p['f2_ct1_w'], (0, 2, 3, 1))                     # (embed,2,2,e2)
    wc = jnp.einsum('cdem,mv->cdev', wt, w1m).reshape(embed, 4 * vis)
    bc = jnp.tile(p['f2_ct1_b'] @ w1m, 4)
    h = fused_matmul([x.reshape(-1, embed)], wc, bias=bc,
                     ln=(p['f2_c1_g'], p['f2_c1_b']), groups=4)
    h = h.reshape(B, H, W, 2, 2, vis)
    h = jnp.transpose(h, (0, 1, 3, 2, 4, 5)).reshape(B, 2 * H, 2 * W, vis)
    out = conv3x3_ln(h, p['f2_c2_w'], p['f2_c2_g'], p['f2_c2_b'])
    return jnp.transpose(out, (0, 3, 1, 2))


def fpn3(p, x):
    B, H, W, embed = x.shape
    vis = p['f3_c1_w'].shape[0]
    w = jnp.transpose(p['f3_c1_w'].reshape(vis, embed))
    h = fused_matmul([x.reshape(-1, embed)], w, ln=(p['f3_c1_g'], p['f3_c1_b']))
    h = h.reshape(B, H, W, vis)
    out = conv3x3_ln(h, p['f3_c2_w'], p['f3_c2_g'], p['f3_c2_b'])
    return jnp.transpose(out, (0, 3, 1, 2))


def fpn4(p, x):
    B, H, W, embed = x.shape
    vis = p['f4_c1_w'].shape[0]
    # 2x2 max-pool fused into the conv1x1+LN kernel (4 strided views, max in-kernel)
    views = [x[:, di::2, dj::2, :].reshape(-1, embed)
             for di in range(2) for dj in range(2)]
    w = jnp.transpose(p['f4_c1_w'].reshape(vis, embed))
    h = fused_matmul(views, w, ln=(p['f4_c1_g'], p['f4_c1_b']))
    h = h.reshape(B, H // 2, W // 2, vis)
    out = conv3x3_ln(h, p['f4_c2_w'], p['f4_c2_g'], p['f4_c2_b'])
    return jnp.transpose(out, (0, 3, 1, 2))


# ----------------------------------------------------------------------------- interpolation glue (XLA)
def nearest_resize_mask(m, out_h, out_w):
    # F.interpolate(mode='nearest'): src = floor(dst * in / out), clamped.
    _, H, W = m.shape
    hi = jnp.minimum((jnp.arange(out_h) * H) // out_h, H - 1)
    wi = jnp.minimum((jnp.arange(out_w) * W) // out_w, W - 1)
    return m[:, hi][:, :, wi]


def _linear_coeffs(in_size, out_size):
    out = jnp.arange(out_size, dtype=jnp.float32)
    src = jnp.maximum((out + 0.5) * (in_size / out_size) - 0.5, 0.0)
    i0 = jnp.minimum(jnp.floor(src).astype(jnp.int32), in_size - 1)
    i1 = jnp.minimum(i0 + 1, in_size - 1)
    w1 = src - i0.astype(jnp.float32)
    return i0, i1, 1.0 - w1, w1


def trilinear_resize_pos(pos, out_d, out_h, out_w):
    # pos: (1, D, H, W) -> trilinear, align_corners=False (matches F.interpolate).
    v = pos[0]
    D, H, W = v.shape
    d0, d1, wd0, wd1 = _linear_coeffs(D, out_d)
    h0, h1, wh0, wh1 = _linear_coeffs(H, out_h)
    w0, w1, ww0, ww1 = _linear_coeffs(W, out_w)
    v = v[d0] * wd0[:, None, None] + v[d1] * wd1[:, None, None]
    v = v[:, h0] * wh0[None, :, None] + v[:, h1] * wh1[None, :, None]
    v = v[:, :, w0] * ww0[None, None, :] + v[:, :, w1] * ww1[None, None, :]
    return v[None]


# ----------------------------------------------------------------------------- full forward
def ped_det_aligned_fpn_forward(p, x_nchw, mask, pos_embed, patch_shape,
                                vis_token_dim, num_feature_levels=3,
                                pos_mode='interpolate'):
    _, _, Hp, Wp = x_nchw.shape
    pos = pos_embed.reshape(1, patch_shape[0], patch_shape[1], pos_embed.shape[2])
    if pos_mode != 'simple_interpolate':
        pos = pos[:, :Hp, :Wp, :]
    pos = jnp.transpose(pos, (0, 3, 1, 2))                       # (1, embed, Hp, Wp)

    # NCHW -> NHWC once, bf16 once (halves HBM traffic; matmuls accumulate in f32)
    x = jnp.transpose(x_nchw, (0, 2, 3, 1)).astype(jnp.bfloat16)
    outs = [fpn4(p, x), fpn3(p, x), fpn2(p, x), fpn1(p, x)]      # reversed order as in torch

    msf, msm, msp = [], [], []
    for o in outs[:num_feature_levels]:
        h, w = o.shape[-2], o.shape[-1]
        msf.append(o)
        msm.append(nearest_resize_mask(mask, h, w))
        msp.append(trilinear_resize_pos(pos, vis_token_dim, h, w))
    return {'mask_features': None,
            'multi_scale_features': msf,
            'multi_scale_masks': msm,
            'multi_scale_pos': msp}


# ----------------------------------------------------------------------------- params
def init_params(key, embed, vis):
    keys = iter(jax.random.split(key, 64))
    wn = lambda shape: 0.02 * jax.random.normal(next(keys), shape, jnp.float32)
    gn = lambda c: 1.0 + 0.02 * jax.random.normal(next(keys), (c,), jnp.float32)
    bn = lambda c: 0.02 * jax.random.normal(next(keys), (c,), jnp.float32)
    e2, e4 = embed // 2, embed // 4
    p = {}
    # fpn1
    p['f1_ct1_w'] = wn((embed, e2, 2, 2)); p['f1_ct1_b'] = wn((e2,))
    p['f1_n1_g'] = gn(e2);                 p['f1_n1_b'] = bn(e2)
    p['f1_ct2_w'] = wn((e2, e4, 2, 2));    p['f1_ct2_b'] = wn((e4,))
    p['f1_c1_w'] = wn((vis, e4, 1, 1));    p['f1_c1_g'] = gn(vis); p['f1_c1_b'] = bn(vis)
    p['f1_c2_w'] = wn((vis, vis, 3, 3));   p['f1_c2_g'] = gn(vis); p['f1_c2_b'] = bn(vis)
    # fpn2
    p['f2_ct1_w'] = wn((embed, e2, 2, 2)); p['f2_ct1_b'] = wn((e2,))
    p['f2_c1_w'] = wn((vis, e2, 1, 1));    p['f2_c1_g'] = gn(vis); p['f2_c1_b'] = bn(vis)
    p['f2_c2_w'] = wn((vis, vis, 3, 3));   p['f2_c2_g'] = gn(vis); p['f2_c2_b'] = bn(vis)
    # fpn3
    p['f3_c1_w'] = wn((vis, embed, 1, 1)); p['f3_c1_g'] = gn(vis); p['f3_c1_b'] = bn(vis)
    p['f3_c2_w'] = wn((vis, vis, 3, 3));   p['f3_c2_g'] = gn(vis); p['f3_c2_b'] = bn(vis)
    # fpn4
    p['f4_c1_w'] = wn((vis, embed, 1, 1)); p['f4_c1_g'] = gn(vis); p['f4_c1_b'] = bn(vis)
    p['f4_c2_w'] = wn((vis, vis, 3, 3));   p['f4_c2_g'] = gn(vis); p['f4_c2_b'] = bn(vis)
    return p


if __name__ == "__main__":
    key = jax.random.PRNGKey(0)
    B, embed, vis = 2, 32, 16
    Hp = Wp = 8
    patch_shape = (8, 8)
    num_feature_levels = 3

    k1, k2, k3, k4 = jax.random.split(key, 4)
    params = init_params(k1, embed, vis)
    x = jax.random.normal(k2, (B, embed, Hp, Wp), jnp.float32)      # backbone features (NCHW)
    mask = jax.random.uniform(k3, (B, Hp, Wp)) > 0.5                # NestedTensor mask
    pos_embed = 0.02 * jax.random.normal(k4, (1, patch_shape[0] * patch_shape[1], embed),
                                         jnp.float32)

    out = ped_det_aligned_fpn_forward(params, x, mask, pos_embed, patch_shape,
                                      vis, num_feature_levels)
    jax.block_until_ready(out)

    assert [tuple(f.shape) for f in out['multi_scale_features']] == \
        [(B, vis, 4, 4), (B, vis, 8, 8), (B, vis, 16, 16)]
    assert [tuple(m.shape) for m in out['multi_scale_masks']] == \
        [(B, 4, 4), (B, 8, 8), (B, 16, 16)]
    assert [tuple(q.shape) for q in out['multi_scale_pos']] == \
        [(1, vis, 4, 4), (1, vis, 8, 8), (1, vis, 16, 16)]
    print("KERNEL_OK")
</pallas_src>

<mosaic_0001>
module attributes {stable_mosaic.version = 11 : i64} {
  func.func @_fused_mm_kernel(%arg0: i32, %arg1: memref<32x32xbf16, #tpu.memory_space<vmem>>, %arg2: memref<32x32xbf16, #tpu.memory_space<vmem>>, %arg3: memref<32x32xbf16, #tpu.memory_space<vmem>>, %arg4: memref<32x32xbf16, #tpu.memory_space<vmem>>, %arg5: memref<32x16xbf16, #tpu.memory_space<vmem>>, %arg6: memref<1x16xf32, #tpu.memory_space<vmem>>, %arg7: memref<1x16xf32, #tpu.memory_space<vmem>>, %arg8: memref<32x16xbf16, #tpu.memory_space<vmem>>) attributes {dimension_semantics = [#tpu.dimension_semantics<parallel>], iteration_bounds = array<i64: 1>, scalar_prefetch = 0 : i64, scratch_operands = 0 : i64, tpu.core_type = #tpu.core_type<tc>, window_params = [{transform_indices = @transform_0, window_bounds = array<i64: 32, 32>}, {transform_indices = @transform_1, window_bounds = array<i64: 32, 32>}, {transform_indices = @transform_2, window_bounds = array<i64: 32, 32>}, {transform_indices = @transform_3, window_bounds = array<i64: 32, 32>}, {pipeline_mode = #tpu.pipeline_mode<synchronous>, transform_indices = @transform_4, window_bounds = array<i64: 32, 16>}, {pipeline_mode = #tpu.pipeline_mode<synchronous>, transform_indices = @transform_5, window_bounds = array<i64: 1, 16>}, {pipeline_mode = #tpu.pipeline_mode<synchronous>, transform_indices = @transform_6, window_bounds = array<i64: 1, 16>}, {transform_indices = @transform_7, window_bounds = array<i64: 32, 16>}]} {
    %c0 = arith.constant 0 : index
    %c0_0 = arith.constant 0 : index
    %0 = vector.load %arg1[%c0, %c0_0] : memref<32x32xbf16, #tpu.memory_space<vmem>>, vector<32x32xbf16>
    %c0_1 = arith.constant 0 : index
    %c0_2 = arith.constant 0 : index
    %1 = vector.load %arg2[%c0_1, %c0_2] : memref<32x32xbf16, #tpu.memory_space<vmem>>, vector<32x32xbf16>
    %2 = arith.maximumf %0, %1 : vector<32x32xbf16>
    %c0_3 = arith.constant 0 : index
    %c0_4 = arith.constant 0 : index
    %3 = vector.load %arg3[%c0_3, %c0_4] : memref<32x32xbf16, #tpu.memory_space<vmem>>, vector<32x32xbf16>
    %4 = arith.maximumf %2, %3 : vector<32x32xbf16>
    %c0_5 = arith.constant 0 : index
    %c0_6 = arith.constant 0 : index
    %5 = vector.load %arg4[%c0_5, %c0_6] : memref<32x32xbf16, #tpu.memory_space<vmem>>, vector<32x32xbf16>
    %6 = arith.maximumf %4, %5 : vector<32x32xbf16>
    %c0_7 = arith.constant 0 : index
    %c0_8 = arith.constant 0 : index
    %7 = vector.load %arg5[%c0_7, %c0_8] : memref<32x16xbf16, #tpu.memory_space<vmem>>, vector<32x16xbf16>
    %cst = arith.constant dense<0.000000e+00> : vector<32x16xf32>
    %8 = tpu.matmul %6, %7, %cst {dimension_numbers = #tpu.dot_dimension_numbers<[1], [0], [0], [1], [0, 0, 1, 1], [], []>} : vector<32x32xbf16>, vector<32x16xbf16>, vector<32x16xf32> -> vector<32x16xf32>
    %c0_9 = arith.constant 0 : index
    %c0_10 = arith.constant 0 : index
    %9 = vector.load %arg6[%c0_9, %c0_10] : memref<1x16xf32, #tpu.memory_space<vmem>>, vector<1x16xf32>
    %c0_11 = arith.constant 0 : index
    %c0_12 = arith.constant 0 : index
    %10 = vector.load %arg7[%c0_11, %c0_12] : memref<1x16xf32, #tpu.memory_space<vmem>>, vector<1x16xf32>
    %cst_13 = arith.constant dense<0.000000e+00> : vector<32xf32>
    %11 = vector.multi_reduction <add>, %8, %cst_13 [1] : vector<32x16xf32> to vector<32xf32>
    %12 = vector.shape_cast %11 : vector<32xf32> to vector<32x1xf32>
    %cst_14 = arith.constant 1.600000e+01 : f32
    %13 = vector.broadcast %cst_14 : f32 to vector<32x1xf32>
    %14 = arith.divf %12, %13 : vector<32x1xf32>
    %15 = vector.broadcast %14 : vector<32x1xf32> to vector<32x16xf32>
    %16 = arith.subf %8, %15 : vector<32x16xf32>
    %17 = arith.mulf %16, %16 : vector<32x16xf32>
    %cst_15 = arith.constant dense<0.000000e+00> : vector<32xf32>
    %18 = vector.multi_reduction <add>, %17, %cst_15 [1] : vector<32x16xf32> to vector<32xf32>
    %19 = vector.shape_cast %18 : vector<32xf32> to vector<32x1xf32>
    %cst_16 = arith.constant 1.600000e+01 : f32
    %20 = vector.broadcast %cst_16 : f32 to vector<32x1xf32>
    %21 = arith.divf %19, %20 : vector<32x1xf32>
    %cst_17 = arith.constant 9.99999997E-7 : f32
    %22 = vector.broadcast %cst_17 : f32 to vector<32x1xf32>
    %23 = arith.addf %21, %22 : vector<32x1xf32>
    %24 = math.rsqrt %23 : vector<32x1xf32>
    %25 = vector.broadcast %24 : vector<32x1xf32> to vector<32x16xf32>
    %26 = arith.mulf %16, %25 : vector<32x16xf32>
    %27 = vector.broadcast %9 : vector<1x16xf32> to vector<32x16xf32>
    %28 = arith.mulf %26, %27 : vector<32x16xf32>
    %29 = vector.broadcast %10 : vector<1x16xf32> to vector<32x16xf32>
    %30 = arith.addf %28, %29 : vector<32x16xf32>
    %31 = arith.truncf %30 : vector<32x16xf32> to vector<32x16xbf16>
    %c0_18 = arith.constant 0 : index
    %c0_19 = arith.constant 0 : index
    %32 = vector.load %arg8[%c0_18, %c0_19] : memref<32x16xbf16, #tpu.memory_space<vmem>>, vector<32x16xbf16>
    tpu.vector_store %arg8[%c0_18, %c0_19], %31 {strides = array<i32>} : memref<32x16xbf16, #tpu.memory_space<vmem>>, vector<32x16xbf16>,
    return
  }
  func.func @transform_0(%arg0: i32) -> (i32, i32) {
    %c0_i32 = arith.constant 0 : i32
    %c0_i32_0 = arith.constant 0 : i32
    return %arg0, %c0_i32 : i32, i32
  }
  func.func @transform_1(%arg0: i32) -> (i32, i32) {
    %c0_i32 = arith.constant 0 : i32
    %c0_i32_0 = arith.constant 0 : i32
    return %arg0, %c0_i32 : i32, i32
  }
  func.func @transform_2(%arg0: i32) -> (i32, i32) {
    %c0_i32 = arith.constant 0 : i32
    %c0_i32_0 = arith.constant 0 : i32
    return %arg0, %c0_i32 : i32, i32
  }
  func.func @transform_3(%arg0: i32) -> (i32, i32) {
    %c0_i32 = arith.constant 0 : i32
    %c0_i32_0 = arith.constant 0 : i32
    return %arg0, %c0_i32 : i32, i32
  }
  func.func @transform_4(%arg0: i32) -> (i32, i32) {
    %c0_i32 = arith.constant 0 : i32
    %c0_i32_0 = arith.constant 0 : i32
    %c0_i32_1 = arith.constant 0 : i32
    return %c0_i32, %c0_i32_0 : i32, i32
  }
  func.func @transform_5(%arg0: i32) -> (i32, i32) {
    %c0_i32 = arith.constant 0 : i32
    %c0_i32_0 = arith.constant 0 : i32
    %c0_i32_1 = arith.constant 0 : i32
    return %c0_i32, %c0_i32_0 : i32, i32
  }
  func.func @transform_6(%arg0: i32) -> (i32, i32) {
    %c0_i32 = arith.constant 0 : i32
    %c0_i32_0 = arith.constant 0 : i32
    %c0_i32_1 = arith.constant 0 : i32
    return %c0_i32, %c0_i32_0 : i32, i32
  }
  func.func @transform_7(%arg0: i32) -> (i32, i32) {
    %c0_i32 = arith.constant 0 : i32
    %c0_i32_0 = arith.constant 0 : i32
    return %arg0, %c0_i32 : i32, i32
  }
}

</mosaic_0001>

<llo_original>
// kernel: tpu_custom_call.1
$region0: #{tpu_custom_call.1}
  #allocation0 [shape = 'u32[]', space=smem, size = 0x4, offset = 0x4, fixed_abs, tag = 'smem constant byte address 0x4 - core index']
  #allocation1 [shape = 'u32[72,128]{1,0:T(1,128)}', space=vmem, size = 0x9000, scoped, tag = 'internal scratch']
  %s0 = inlined_call_operand.vmem [shape: bf16[32,32], index: 0, kind: input, shape index: {}]
  %s1 = inlined_call_operand.hbm [shape: bf16[32,32], index: 1, kind: input, shape index: {}]
  %s2 = inlined_call_operand.hbm [shape: bf16[32,32], index: 2, kind: input, shape index: {}]
  %s3 = inlined_call_operand.hbm [shape: bf16[32,32], index: 3, kind: input, shape index: {}]
  %s4 = inlined_call_operand.vmem [shape: bf16[32,16], index: 4, kind: input, shape index: {}]
  %s5 = inlined_call_operand.vmem [shape: f32[1,16], index: 5, kind: input, shape index: {}]
  %s6 = inlined_call_operand.vmem [shape: f32[1,16], index: 6, kind: input, shape index: {}]
  %s7 = inlined_call_operand.vmem [shape: bf16[32,16], index: 7, kind: output, shape index: {}]
  %s8 = sld [smem:[#allocation0]]
  $region50: #{tpu_custom_call.1} parent=0
    _
  %s10 = ssub.s32 1, %s8
  %s11 = scalar_select 0, %s10, %s8
  $region1: #{tpu_custom_call.1} parent=0
    #allocation2 [shape = 'u8[8192]{0}', space=vmem, size = 0x2000, scoped, tag = 'input window, operand 1, single buffered']
    #allocation3 [shape = 's32[1]{0}', space=sflag, size = 0x4, scoped, tag = 'scoped memory for tpu_custom_call.1']
    #allocation4 [shape = 'u8[8192]{0}', space=vmem, size = 0x2000, scoped, tag = 'input window, operand 2, single buffered']
    #allocation5 [shape = 's32[1]{0}', space=sflag, size = 0x4, scoped, tag = 'scoped memory for tpu_custom_call.1']
    #allocation6 [shape = 'u8[8192]{0}', space=vmem, size = 0x2000, scoped, tag = 'input window, operand 3, single buffered']
    %12 = vsyncpa [#allocation3], 0
    %13 = vsyncpa [#allocation5], 0
    // Predicated region
    $region2: #{tpu_custom_call.1} parent=1 // pred_check
      _
    $region3: #{tpu_custom_call.1} parent=1 // pred_check_branch
      %15 = sbr.rel (0) target = $region5
    $region4: #{tpu_custom_call.1} parent=1 // pred_region
      _
    $region5: #{tpu_custom_call.1} parent=1 // pred_fallthru
      _
    // Predicated region
    $region6: #{tpu_custom_call.1} parent=1 // pred_check
      _
    $region7: #{tpu_custom_call.1} parent=1 // pred_check_branch
      %17 = sbr.rel (0) target = $region9
    $region8: #{tpu_custom_call.1} parent=1 // pred_region
      %19 = vsyncadd [#allocation3], 0
      %s20 = sshll.u32 %s1, 4
      %s21 = int_to_ptr.hbm [resolvable:$true] %s20
      %s22 = sshll.u32 [#allocation2], 4
      %s23 = int_to_ptr.vmem [resolvable:$true] %s22
      %28 = dma.hbm_to_vmem [thread:$0]  %s21, 256, %s23, [#allocation3], 64, 64, 4
    $region9: #{tpu_custom_call.1} parent=1 // pred_fallthru
      _
    // Predicated region
    $region10: #{tpu_custom_call.1} parent=1 // pred_check
      _
    $region11: #{tpu_custom_call.1} parent=1 // pred_check_branch
      %30 = sbr.rel (0) target = $region13
    $region12: #{tpu_custom_call.1} parent=1 // pred_region
      %32 = vsyncadd [#allocation5], 0
      %s33 = sshll.u32 %s2, 4
      %s34 = int_to_ptr.hbm [resolvable:$true] %s33
      %s35 = sshll.u32 [#allocation4], 4
      %s36 = int_to_ptr.vmem [resolvable:$true] %s35
      %41 = dma.hbm_to_vmem [thread:$0]  %s34, 256, %s36, [#allocation5], 64, 64, 4
    $region13: #{tpu_custom_call.1} parent=1 // pred_fallthru
      _
    // Predicated region
    $region14: #{tpu_custom_call.1} parent=1 // pred_check
      _
    $region15: #{tpu_custom_call.1} parent=1 // pred_check_branch
      %43 = sbr.rel (0) target = $region17
    $region16: #{tpu_custom_call.1} parent=1 // pred_region
      %45 = vsyncadd [#allocation5], 0
      %s46 = sshll.u32 %s3, 4
      %s47 = int_to_ptr.hbm [resolvable:$true] %s46
      %s48 = sshll.u32 [#allocation6], 4
      %s49 = int_to_ptr.vmem [resolvable:$true] %s48
      %54 = dma.hbm_to_vmem [thread:$0]  %s47, 256, %s49, [#allocation5], 64, 64, 4
    $region17: #{tpu_custom_call.1} parent=1 // pred_fallthru
      _
    // Predicated region
    $region18: #{tpu_custom_call.1} parent=1 // pred_check
      _
    $region19: #{tpu_custom_call.1} parent=1 // pred_check_branch
      %56 = sbr.rel (0) target = $region21
    $region20: #{tpu_custom_call.1} parent=1 // pred_region
      _
    $region21: #{tpu_custom_call.1} parent=1 // pred_fallthru
      _
    // Predicated region
    $region22: #{tpu_custom_call.1} parent=1 // pred_check
      _
    $region23: #{tpu_custom_call.1} parent=1 // pred_check_branch
      %58 = sbr.rel (0) target = $region25
    $region24: #{tpu_custom_call.1} parent=1 // pred_region
      _
    $region25: #{tpu_custom_call.1} parent=1 // pred_fallthru
      _
    // Predicated region
    $region26: #{tpu_custom_call.1} parent=1 // pred_check
      _
    $region27: #{tpu_custom_call.1} parent=1 // pred_check_branch
      %60 = sbr.rel (0) target = $region29
    $region28: #{tpu_custom_call.1} parent=1 // pred_region
      _
    $region29: #{tpu_custom_call.1} parent=1 // pred_fallthru
      _
    // Predicated region
    $region30: #{tpu_custom_call.1} parent=1 // pred_check
      _
    $region31: #{tpu_custom_call.1} parent=1 // pred_check_branch
      %62 = sbr.rel (0) target = $region33
    $region32: #{tpu_custom_call.1} parent=1 // pred_region
      %64 = dma.done [#allocation3], 256
    $region33: #{tpu_custom_call.1} parent=1 // pred_fallthru
      _
    // Predicated region
    $region34: #{tpu_custom_call.1} parent=1 // pred_check
      _
    $region35: #{tpu_custom_call.1} parent=1 // pred_check_branch
      %66 = sbr.rel (0) target = $region37
    $region36: #{tpu_custom_call.1} parent=1 // pred_region
      %68 = dma.done [#allocation5], 256
    $region37: #{tpu_custom_call.1} parent=1 // pred_fallthru
      _
    // Predicated region
    $region38: #{tpu_custom_call.1} parent=1 // pred_check
      _
    $region39: #{tpu_custom_call.1} parent=1 // pred_check_branch
      %70 = sbr.rel (0) target = $region41
    $region40: #{tpu_custom_call.1} parent=1 // pred_region
      %72 = dma.done [#allocation5], 256
    $region41: #{tpu_custom_call.1} parent=1 // pred_fallthru
      _
    %v74 = vld [vmem:[%s0] sm:$0xf]
    %v75 = vld [vmem:[%s0 + $0x4] sm:$0xf]
    %v76 = vld [vmem:[%s0 + $0x8] sm:$0xf]
    %v77 = vld [vmem:[%s0 + $0xc] sm:$0xf]
    %v78 = vld [vmem:[#allocation2] sm:$0xf]
    %v79 = vld [vmem:[#allocation2 + $0x4] sm:$0xf]
    %v80 = vld [vmem:[#allocation2 + $0x8] sm:$0xf]
    %v81 = vld [vmem:[#allocation2 + $0xc] sm:$0xf]
    %v82 = vunpack.c.l.bf16 %v74
    %v83 = vunpack.c.l.bf16 %v75
    %v84 = vunpack.c.l.bf16 %v76
    %v85 = vunpack.c.l.bf16 %v77
    %v86 = vunpack.c.l.bf16 %v78
    %v87 = vunpack.c.l.bf16 %v79
    %v88 = vunpack.c.l.bf16 %v80
    %v89 = vunpack.c.l.bf16 %v81
    %v90 = vmax.f32 %v82, %v86
    %v91 = vmax.f32 %v83, %v87
    %v92 = vmax.f32 %v84, %v88
    %v93 = vmax.f32 %v85, %v89
    %v94 = vpack.c.bf16 %v90, %v90
    %v95 = vpack.c.bf16 %v91, %v91
    %v96 = vpack.c.bf16 %v92, %v92
    %v97 = vpack.c.bf16 %v93, %v93
    %v98 = vld [vmem:[#allocation4] sm:$0xf]
    %v99 = vld [vmem:[#allocation4 + $0x4] sm:$0xf]
    %v100 = vld [vmem:[#allocation4 + $0x8] sm:$0xf]
    %v101 = vld [vmem:[#allocation4 + $0xc] sm:$0xf]
    %v102 = vunpack.c.l.bf16 %v94
    %v103 = vunpack.c.l.bf16 %v95
    %v104 = vunpack.c.l.bf16 %v96
    %v105 = vunpack.c.l.bf16 %v97
    %v106 = vunpack.c.l.bf16 %v98
    %v107 = vunpack.c.l.bf16 %v99
    %v108 = vunpack.c.l.bf16 %v100
    %v109 = vunpack.c.l.bf16 %v101
    %v110 = vmax.f32 %v102, %v106
    %v111 = vmax.f32 %v103, %v107
    %v112 = vmax.f32 %v104, %v108
    %v113 = vmax.f32 %v105, %v109
    %v114 = vpack.c.bf16 %v110, %v110
    %v115 = vpack.c.bf16 %v111, %v111
    %v116 = vpack.c.bf16 %v112, %v112
    %v117 = vpack.c.bf16 %v113, %v113
    %v118 = vld [vmem:[#allocation6] sm:$0xf]
    %v119 = vld [vmem:[#allocation6 + $0x4] sm:$0xf]
    %v120 = vld [vmem:[#allocation6 + $0x8] sm:$0xf]
    %v121 = vld [vmem:[#allocation6 + $0xc] sm:$0xf]
    %v122 = vunpack.c.l.bf16 %v114
    %v123 = vunpack.c.l.bf16 %v115
    %v124 = vunpack.c.l.bf16 %v116
    %v125 = vunpack.c.l.bf16 %v117
    %v126 = vunpack.c.l.bf16 %v118
    %v127 = vunpack.c.l.bf16 %v119
    %v128 = vunpack.c.l.bf16 %v120
    %v129 = vunpack.c.l.bf16 %v121
    %v130 = vmax.f32 %v122, %v126
    %v131 = vmax.f32 %v123, %v127
    %v132 = vmax.f32 %v124, %v128
    %v133 = vmax.f32 %v125, %v129
    %v134 = vpack.c.bf16 %v131, %v130
    %v135 = vpack.c.bf16 %v133, %v132
    %v136 = vld [vmem:[%s4] sm:$0xf]
    %v137 = vld [vmem:[%s4 + $0x4] sm:$0xf]
    %v138 = vld [vmem:[%s4 + $0x8] sm:$0xf]
    %v139 = vld [vmem:[%s4 + $0xc] sm:$0xf]
    %v144 = vunpack.c.l.b16 %v136
    %v145 = vunpack.c.l.b16 %v137
    %v146 = vunpack.c.l.b16 %v138
    %v147 = vunpack.c.l.b16 %v139
    %v148 = vpack.c.b16 %v145, %v144
    %v149 = vpack.c.b16 %v147, %v146
    %vm152 = vcmask 261120
    %v154 = vsel %vm152, %v134, 0
    %v157 = vsel %vm152, %v135, 0
    %159 = vmatpush.bf16.msra.mxu0 0
    %160 = vmatpush.bf16.msra.mxu0 0
    %161 = vmatpush.bf16.msra.mxu0 0
    %162 = vmatpush.bf16.msra.mxu0 0
    %163 = vmatpush.bf16.msra.mxu0 0
    %164 = vmatpush.bf16.msra.mxu0 0
    %165 = vmatpush.bf16.msra.mxu0 %v149
    %166 = vmatpush.bf16.msra.mxu0 %v148
    %167 = vmatmul.bf16.gmra.mxu0 %v154
    %v168 = vpop.f32.mrf.mxu0
    %v169 = vadd.f32 0.0, %v168
    %v170 = vpop.f32.mrf.mxu0
    %v171 = vadd.f32 0.0, %v170
    %172 = vmatmul.bf16.gmra.mxu0 %v157
    %v173 = vpop.f32.mrf.mxu0
    %v174 = vadd.f32 0.0, %v173
    %v175 = vpop.f32.mrf.mxu0
    %v176 = vadd.f32 0.0, %v175
    %177 = vdwg.mxu0
    %v178 = vld [vmem:[%s5] sm:$0x1]
    %v179 = vld [vmem:[%s6] sm:$0x1]
    %vm180 = vcmask 130048
    %v181 = vsel %vm180, %v169, 0.0
    %182 = vadd.xlane.f32.xlu0 %v181
    %v183 = vpop.xlane.xlu0 %182
    %v184 = vsel %vm180, %v171, 0.0
    %185 = vadd.xlane.f32.xlu0 %v184
    %v186 = vpop.xlane.xlu0 %185
    %v187 = vsel %vm180, %v174, 0.0
    %188 = vadd.xlane.f32.xlu0 %v187
    %v189 = vpop.xlane.xlu0 %188
    %v190 = vsel %vm180, %v176, 0.0
    %191 = vadd.xlane.f32.xlu0 %v190
    %v192 = vpop.xlane.xlu0 %191
    %v193 = vrcp.pop 16.0
    %v194 = vmul.f32 16.0, %v193
    %v195 = vsub.f32 1.0, %v194
    %v196 = vmul.f32 %v193, %v195
    %v197 = vadd.f32 %v193, %v196
    %vm198 = vweird.f32 %v193
    %v199 = vsel %vm198, %v193, %v197
    %v200 = vmul.f32 %v183, %v199
    %v201 = vmul.f32 %v186, %v199
    %v202 = vmul.f32 %v189, %v199
    %v203 = vmul.f32 %v192, %v199
    %v204 = vsub.f32 %v169, %v200
    %v205 = vsub.f32 %v171, %v201
    %v206 = vsub.f32 %v174, %v202
    %v207 = vsub.f32 %v176, %v203
    %v208 = vmul.f32 %v204, %v204
    %v209 = vmul.f32 %v205, %v205
    %v210 = vmul.f32 %v206, %v206
    %v211 = vmul.f32 %v207, %v207
    %v212 = vsel %vm180, %v208, 0.0
    %213 = vadd.xlane.f32.xlu0 %v212
    %v214 = vpop.xlane.xlu0 %213
    %v215 = vsel %vm180, %v209, 0.0
    %216 = vadd.xlane.f32.xlu0 %v215
    %v217 = vpop.xlane.xlu0 %216
    %v218 = vsel %vm180, %v210, 0.0
    %219 = vadd.xlane.f32.xlu0 %v218
    %v220 = vpop.xlane.xlu0 %219
    %v221 = vsel %vm180, %v211, 0.0
    %222 = vadd.xlane.f32.xlu0 %v221
    %v223 = vpop.xlane.xlu0 %222
    %v224 = vmul.f32 %v214, %v199
    %v225 = vmul.f32 %v217, %v199
    %v226 = vmul.f32 %v220, %v199
    %v227 = vmul.f32 %v223, %v199
    %v228 = vadd.f32 %v224, 1e-06
    %v229 = vadd.f32 %v225, 1e-06
    %v230 = vadd.f32 %v226, 1e-06
    %v231 = vadd.f32 %v227, 1e-06
    %v232 = vrsqrt.pop %v228
    %v233 = vmul.f32 %v232, %v228
    %v234 = vmul.f32 %v233, %v232
    %v235 = vmul.f32 0.5, %v234
    %v236 = vsub.f32 1.5, %v235
    %v237 = vmul.f32 %v232, %v236
    %vm238 = vweird.f32 %v228
    %vm239 = vweird.f32 %v232
    %vm240 = vmor %vm238, %vm239
    %v241 = vsel %vm240, %v232, %v237
    %v242 = vrsqrt.pop %v229
    %v243 = vmul.f32 %v242, %v229
    %v244 = vmul.f32 %v243, %v242
    %v245 = vmul.f32 0.5, %v244
    %v246 = vsub.f32 1.5, %v245
    %v247 = vmul.f32 %v242, %v246
    %vm248 = vweird.f32 %v229
    %vm249 = vweird.f32 %v242
    %vm250 = vmor %vm248, %vm249
    %v251 = vsel %vm250, %v242, %v247
    %v252 = vrsqrt.pop %v230
    %v253 = vmul.f32 %v252, %v230
    %v254 = vmul.f32 %v253, %v252
    %v255 = vmul.f32 0.5, %v254
    %v256 = vsub.f32 1.5, %v255
    %v257 = vmul.f32 %v252, %v256
    %vm258 = vweird.f32 %v230
    %vm259 = vweird.f32 %v252
    %vm260 = vmor %vm258, %vm259
    %v261 = vsel %vm260, %v252, %v257
    %v262 = vrsqrt.pop %v231
    %v263 = vmul.f32 %v262, %v231
    %v264 = vmul.f32 %v263, %v262
    %v265 = vmul.f32 0.5, %v264
    %v266 = vsub.f32 1.5, %v265
    %v267 = vmul.f32 %v262, %v266
    %vm268 = vweird.f32 %v231
    %vm269 = vweird.f32 %v262
    %vm270 = vmor %vm268, %vm269
    %v271 = vsel %vm270, %v262, %v267
    %v272 = vmul.f32 %v204, %v241
    %v273 = vmul.f32 %v205, %v251
    %v274 = vmul.f32 %v206, %v261
    %v275 = vmul.f32 %v207, %v271
    %v277 = vperm.slane %v178, 0
    %v279 = vmul.f32 %v272, %v277
    %v280 = vmul.f32 %v273, %v277
    %v281 = vmul.f32 %v274, %v277
    %v282 = vmul.f32 %v275, %v277
    %v284 = vperm.slane %v179, 0
    %v286 = vadd.f32 %v279, %v284
    %v287 = vadd.f32 %v280, %v284
    %v288 = vadd.f32 %v281, %v284
    %v289 = vadd.f32 %v282, %v284
    %v290 = vpack.c.bf16 %v286, %v286
    %v291 = vpack.c.bf16 %v287, %v287
    %v292 = vpack.c.bf16 %v288, %v288
    %v293 = vpack.c.bf16 %v289, %v289
    %vm294 = vcmask 125952
    %295 = vst.msk [vmem:[%s7] sm:$0xf] %vm294, %v290
    %296 = vst.msk [vmem:[%s7 + $0x4] sm:$0xf] %vm294, %v291
    %297 = vst.msk [vmem:[%s7 + $0x8] sm:$0xf] %vm294, %v292
    %298 = vst.msk [vmem:[%s7 + $0xc] sm:$0xf] %vm294, %v293
    // Predicated region
    $region42: #{tpu_custom_call.1} parent=1 // pred_check
      _
    $region43: #{tpu_custom_call.1} parent=1 // pred_check_branch
      %300 = sbr.rel (0) target = $region45
    $region44: #{tpu_custom_call.1} parent=1 // pred_region
      _
    $region45: #{tpu_custom_call.1} parent=1 // pred_fallthru
      _
    // Predicated region
    $region46: #{tpu_custom_call.1} parent=1 // pred_check
      _
    $region47: #{tpu_custom_call.1} parent=1 // pred_check_branch
      %302 = sbr.rel (0) target = $region49
    $region48: #{tpu_custom_call.1} parent=1 // pred_region
      _
    $region49: #{tpu_custom_call.1} parent=1 // pred_fallthru
      _
    %303 = vsyncpa [#allocation3], 1
    %304 = vsyncpa [#allocation5], 1

</llo_original>
